<compile_context>
chip_gen: v7x
topology: tpu7x:2x2x1
jax: 0.10.0
libtpu: 0.0.40
codegen_flags: <defaults>
</compile_context>

<pallas_src>
import functools

import jax
import jax.numpy as jnp
from jax.experimental import pallas as pl
from jax.experimental.pallas import tpu as pltpu

_MIB = 1024 * 1024
_LANE_CANDIDATES = (4096, 2048, 1024, 512, 256, 128)
_MIN_PALLAS_BYTES = 1 * _MIB  # below this, XLA's fused elementwise is as fast


def _silu_kernel(x_ref, o_ref, *, compute_dtype):
    x = x_ref[...].astype(compute_dtype)
    # exp on the EUP, mul/add on the VPU — purely elementwise on the VMEM tile.
    o_ref[...] = (x * jax.nn.sigmoid(x)).astype(o_ref.dtype)


def _round_up(a, m):
    return ((a + m - 1) // m) * m


@functools.lru_cache(maxsize=1)
def _chip_profile():
    """Returns (vmem_limit_bytes, target_block_bytes, num_tensorcores)."""
    vmem_capacity = None
    num_tc = None
    try:
        info = pltpu.get_tpu_info()
        vmem_capacity = getattr(info, "vmem_capacity_bytes", None)
        for name in ("num_tensorcores", "tensorcore_count", "num_cores", "core_count"):
            v = getattr(info, name, None)
            if isinstance(v, int) and v > 0:
                num_tc = v
                break
    except Exception:
        pass
    if vmem_capacity is None:
        vmem_capacity = 64 * _MIB  # conservative (v7x-sized) default
    if num_tc is None:
        # Heuristic: v7x has 2 TCs and 64 MiB VMEM/TC; v5e/v6e have 1 TC, 128 MiB.
        num_tc = 2 if vmem_capacity <= 96 * _MIB else 1
    if vmem_capacity >= 100 * _MIB:      # v5e / v6e: plenty of physical VMEM
        vmem_limit = 64 * _MIB
    else:                                # v7x (or unknown): 64 MiB physical
        vmem_limit = 32 * _MIB
    target_block_bytes = 4 * _MIB        # 4x (in+out double-buffered) fits the limit
    return vmem_limit, target_block_bytes, num_tc


def silu(x, *, force_pallas=False):
    """Elementwise SiLU.  Pallas path for multi-MiB float tensors; jnp otherwise."""
    orig_shape = x.shape
    orig_dtype = x.dtype
    n = x.size

    # Non-float inputs: documented fallback — compute in f32 (torch would reject).
    if not jnp.issubdtype(orig_dtype, jnp.floating):
        xf = x.astype(jnp.float32)
        return xf * jax.nn.sigmoid(xf)

    if n == 0:
        return x

    itemsize = jnp.dtype(orig_dtype).itemsize
    if not force_pallas and n * itemsize < _MIN_PALLAS_BYTES:
        # Tiny tensor: fixed pallas_call/pipeline setup would dominate.
        xf = x.astype(jnp.float32)
        return (xf * jax.nn.sigmoid(xf)).astype(orig_dtype)

    vmem_limit, target_block_bytes, num_tc = _chip_profile()
    sublane_quant = {4: 8, 2: 16, 1: 32}.get(itemsize, 8)
    # Compute dtype: f32 for f32 inputs; native for bf16/f16 (no f32 temp blowup).
    compute_dtype = orig_dtype if orig_dtype in (jnp.bfloat16, jnp.float16) else jnp.float32

    flat = x.reshape(-1)

    # --- lane-dense 2D factorization (rows, lanes), avoiding padding ----------
    lanes = None
    rows = 0
    pad = 0
    for L in _LANE_CANDIDATES:                     # rows also multiple of quantum
        if n % L == 0 and (n // L) % sublane_quant == 0:
            lanes, rows = L, n // L
            break
    if lanes is None:                              # allow ragged rows (masked block)
        for L in _LANE_CANDIDATES:
            if n % L == 0 and (n // L) >= sublane_quant:
                lanes, rows = L, n // L
                break
    if lanes is None:                              # last resort: pad
        lanes = 1024 if n >= (1 << 20) else 128
        padded_n = _round_up(n, sublane_quant * lanes)
        pad = padded_n - n
        flat = jnp.pad(flat, (0, pad))
        rows = padded_n // lanes

    x2d = flat.reshape(rows, lanes)

    # --- row-tile selection: ~4 MiB blocks, multiple of the sublane quantum ---
    tr = target_block_bytes // (lanes * itemsize)
    tr = max(sublane_quant, (tr // sublane_quant) * sublane_quant)
    if tr >= rows:
        tr = rows  # block dim == full array dim is always legal

    if num_tc > 1 and rows >= 2 * sublane_quant:
        # Balanced split so ("parallel",) can shard across both v7x TCs:
        # >=4 steps per core when the tensor is big enough, else 1 per core.
        target_steps = 4 * num_tc if rows >= 4 * num_tc * sublane_quant else num_tc
        tr_mc = max(sublane_quant, (rows // target_steps // sublane_quant) * sublane_quant)
        tr = min(tr, tr_mc)

    grid = (pl.cdiv(rows, tr),)

    kernel = functools.partial(_silu_kernel, compute_dtype=compute_dtype)
    out2d = pl.pallas_call(
        kernel,
        out_shape=jax.ShapeDtypeStruct((rows, lanes), orig_dtype),
        grid_spec=pltpu.PrefetchScalarGridSpec(
            num_scalar_prefetch=0,
            grid=grid,
            in_specs=[pl.BlockSpec((tr, lanes), lambda i: (i, 0))],
            out_specs=pl.BlockSpec((tr, lanes), lambda i: (i, 0)),
        ),
        compiler_params=pltpu.CompilerParams(
            dimension_semantics=("parallel",),
            vmem_limit_bytes=vmem_limit,
        ),
    )(x2d)

    out_flat = out2d.reshape(-1)
    if pad:
        out_flat = out_flat[:n]
    return out_flat.reshape(orig_shape)


def silu_ref(x):
    xf = x.astype(jnp.float32)
    return (xf * jax.nn.sigmoid(xf)).astype(x.dtype)


if __name__ == "__main__":
    key = jax.random.PRNGKey(0)
    # NCHW, matching the PyTorch convention for this UNet block.
    x = jax.random.normal(key, (2, 4, 16, 16), dtype=jnp.float32)
    y_ref = silu_ref(x)

    # Default dispatch (small-input fast path).
    y_fast = silu(x)
    jax.block_until_ready(y_fast)
    assert y_fast.shape == x.shape and y_fast.dtype == x.dtype
    assert jnp.allclose(y_fast, y_ref, atol=1e-5, rtol=1e-5), "fast-path mismatch"

    # Same input forced through the Pallas kernel.
    y_pl = silu(x, force_pallas=True)
    jax.block_until_ready(y_pl)
    assert y_pl.shape == x.shape and y_pl.dtype == x.dtype
    assert jnp.allclose(y_pl, y_ref, atol=1e-5, rtol=1e-5), "pallas mismatch"

    # Slightly larger tensor to exercise the multi-row tiling / split path.
    x2 = jax.random.normal(jax.random.PRNGKey(1), (4, 8, 32, 64), dtype=jnp.float32)
    y2 = silu(x2, force_pallas=True)
    jax.block_until_ready(y2)
    assert jnp.allclose(y2, silu_ref(x2), atol=1e-5, rtol=1e-5), "tiled pallas mismatch"

    print("KERNEL_OK")
</pallas_src>

<mosaic_0001>
module attributes {stable_mosaic.version = 11 : i64} {
  func.func @_silu_kernel(%arg0: i32, %arg1: memref<8x256xf32, #tpu.memory_space<vmem>>, %arg2: memref<8x256xf32, #tpu.memory_space<vmem>>) attributes {dimension_semantics = [#tpu.dimension_semantics<parallel>], iteration_bounds = array<i64: 1>, scalar_prefetch = 0 : i64, scratch_operands = 0 : i64, tpu.core_type = #tpu.core_type<tc>, window_params = [{transform_indices = @transform_0, window_bounds = array<i64: 8, 256>}, {transform_indices = @transform_1, window_bounds = array<i64: 8, 256>}]} {
    %c0 = arith.constant 0 : index
    %c0_0 = arith.constant 0 : index
    %0 = vector.load %arg1[%c0, %c0_0] : memref<8x256xf32, #tpu.memory_space<vmem>>, vector<8x256xf32>
    %1 = arith.negf %0 : vector<8x256xf32>
    %2 = math.exp %1 : vector<8x256xf32>
    %cst = arith.constant 1.000000e+00 : f32
    %3 = vector.broadcast %cst : f32 to vector<8x256xf32>
    %4 = arith.addf %3, %2 : vector<8x256xf32>
    %5 = arith.divf %3, %4 : vector<8x256xf32>
    %6 = arith.mulf %0, %5 : vector<8x256xf32>
    %c0_1 = arith.constant 0 : index
    %c0_2 = arith.constant 0 : index
    %7 = vector.load %arg2[%c0_1, %c0_2] : memref<8x256xf32, #tpu.memory_space<vmem>>, vector<8x256xf32>
    tpu.vector_store %arg2[%c0_1, %c0_2], %6 {strides = array<i32>} : memref<8x256xf32, #tpu.memory_space<vmem>>, vector<8x256xf32>,
    return
  }
  func.func @transform_0(%arg0: i32) -> (i32, i32) {
    %c0_i32 = arith.constant 0 : i32
    %c0_i32_0 = arith.constant 0 : i32
    return %arg0, %c0_i32 : i32, i32
  }
  func.func @transform_1(%arg0: i32) -> (i32, i32) {
    %c0_i32 = arith.constant 0 : i32
    %c0_i32_0 = arith.constant 0 : i32
    return %arg0, %c0_i32 : i32, i32
  }
}

</mosaic_0001>

<llo_original>
// kernel: tpu_custom_call.1
$region0: #{tpu_custom_call.1}
  #allocation0 [shape = 'u32[]', space=smem, size = 0x4, offset = 0x4, fixed_abs, tag = 'smem constant byte address 0x4 - core index']
  #allocation1 [shape = 'u32[144,128]{1,0:T(1,128)}', space=vmem, size = 0x12000, scoped, tag = 'internal scratch']
  %s0 = inlined_call_operand.hbm [shape: f32[8,256], index: 0, kind: input, shape index: {}]
  %s1 = inlined_call_operand.hbm [shape: f32[8,256], index: 1, kind: output, shape index: {}]
  %s2 = sld [smem:[#allocation0]]
  $region18: #{tpu_custom_call.1} parent=0
    _
  %s4 = ssub.s32 1, %s2
  %s5 = scalar_select 0, %s4, %s2
  $region1: #{tpu_custom_call.1} parent=0
    #allocation2 [shape = 'u8[8192]{0}', space=vmem, size = 0x2000, scoped, tag = 'input window, operand 0, single buffered']
    #allocation3 [shape = 's32[1]{0}', space=sflag, size = 0x4, scoped, tag = 'scoped memory for tpu_custom_call.1']
    #allocation4 [shape = 's32[1]{0}', space=sflag, size = 0x4, scoped, tag = 'scoped memory for tpu_custom_call.1']
    #allocation5 [shape = 'u8[8192]{0}', space=vmem, size = 0x2000, scoped, tag = 'output window, operand 0, single buffered']
    %6 = vsyncpa [#allocation3], 0
    %7 = vsyncpa [#allocation4], 0
    // Predicated region
    $region2: #{tpu_custom_call.1} parent=1 // pred_check
      _
    $region3: #{tpu_custom_call.1} parent=1 // pred_check_branch
      %9 = sbr.rel (0) target = $region5
    $region4: #{tpu_custom_call.1} parent=1 // pred_region
      %s11 = ssub.s32 256, 256
      %12 = vsyncadd [#allocation3], %s11
      %s14 = sshll.u32 [#allocation2], 4
      %s15 = int_to_ptr.vmem [resolvable:$true] %s14
      %17 = dma.hbm_to_vmem [thread:$0]  %s0, 256, %s15, [#allocation3]
    $region5: #{tpu_custom_call.1} parent=1 // pred_fallthru
      _
    // Predicated region
    $region6: #{tpu_custom_call.1} parent=1 // pred_check
      _
    $region7: #{tpu_custom_call.1} parent=1 // pred_check_branch
      %19 = sbr.rel (0) target = $region9
    $region8: #{tpu_custom_call.1} parent=1 // pred_region
      %20 = dma.done [#allocation3], 256
    $region9: #{tpu_custom_call.1} parent=1 // pred_fallthru
      _
    %v21 = vld [vmem:[#allocation2] sm:$0xff]
    %v22 = vld [vmem:[#allocation2 + $0x8] sm:$0xff]
    %v23 = vxor.u32 %v21, 2147483648
    %v24 = vxor.u32 %v22, 2147483648
    %v25 = vmul.f32 %v23, 1.442695
    %v26 = vpow.pop %v25
    %v27 = vmul.f32 %v24, 1.442695
    %v28 = vpow.pop %v27
    %v29 = vadd.f32 %v26, 1.0
    %v30 = vadd.f32 %v28, 1.0
    %v31 = vrcp.pop %v29
    %v32 = vmul.f32 1.0, %v31
    %v33 = vrcp.pop %v30
    %v34 = vmul.f32 1.0, %v33
    %v35 = vmul.f32 %v21, %v32
    %v36 = vmul.f32 %v22, %v34
    %37 = vst [vmem:[#allocation5] sm:$0xff] %v35
    %38 = vst [vmem:[#allocation5 + $0x8] sm:$0xff] %v36
    // Predicated region
    $region10: #{tpu_custom_call.1} parent=1 // pred_check
      _
    $region11: #{tpu_custom_call.1} parent=1 // pred_check_branch
      %40 = sbr.rel (0) target = $region13
    $region12: #{tpu_custom_call.1} parent=1 // pred_region
      %s42 = ssub.s32 256, 256
      %43 = vsyncadd [#allocation4], %s42
      %s45 = sshll.u32 [#allocation5], 4
      %s46 = int_to_ptr.vmem [resolvable:$true] %s45
      %48 = dma.vmem_to_hbm [thread:$0]  %s46, 256, %s1, [#allocation4]
    $region13: #{tpu_custom_call.1} parent=1 // pred_fallthru
      _
    // Predicated region
    $region14: #{tpu_custom_call.1} parent=1 // pred_check
      _
    $region15: #{tpu_custom_call.1} parent=1 // pred_check_branch
      %50 = sbr.rel (0) target = $region17
    $region16: #{tpu_custom_call.1} parent=1 // pred_region
      %51 = dma.done [#allocation4], 256
    $region17: #{tpu_custom_call.1} parent=1 // pred_fallthru
      _
    %52 = vsyncpa [#allocation3], 1
    %53 = vsyncpa [#allocation4], 1

</llo_original>
